<compile_context>
chip_gen: v7x
topology: tpu7x:2x2x1
jax: 0.10.0
libtpu: 0.0.40
codegen_flags: <defaults>
</compile_context>

<pallas_src>
import jax
import jax.numpy as jnp
import numpy as np
from jax.experimental import pallas as pl
from jax.experimental.pallas import tpu as pltpu


def _l1_loss_kernel(maps_ref, row_ref, col_ref, tgt_ref, msk_ref, out_ref):
    # maps_ref: (1, 1, h, w)       native dtype (one batch, one channel)
    # row_ref : (1, n_pad, 1)      int32   (ind // w, padded with 0)
    # col_ref : (1, n_pad, 1)      int32   (ind %  w, padded with 0)
    # tgt_ref : (1, 1, n_pad, 1)   float32 (this channel's targets, padded 0)
    # msk_ref : (1, n_pad, 1)      float32 (padded with 0)
    # out_ref : (1, 1, 1, 128)     float32 partial numerator (broadcast to lanes)
    h = maps_ref.shape[2]
    w = maps_ref.shape[3]
    n_pad = row_ref.shape[1]

    row = row_ref[0]                                   # (n_pad, 1) int32
    col = col_ref[0]                                   # (n_pad, 1) int32

    # Stage 1: row gather via one-hot matmul on the MXU.
    row_iota = jax.lax.broadcasted_iota(jnp.int32, (n_pad, h), 1)
    onehot = (row_iota == row).astype(jnp.float32)     # (n_pad, h)
    maps_c = maps_ref[0, 0].astype(jnp.float32)        # (h, w), cast in-kernel
    rows = jnp.dot(onehot, maps_c,
                   preferred_element_type=jnp.float32)  # (n_pad, w)

    # Stage 2: column pick via lane mask + lane reduction.
    col_iota = jax.lax.broadcasted_iota(jnp.int32, (n_pad, w), 1)
    colmask = col_iota == col                          # (n_pad, w) bool
    picked = jnp.sum(jnp.where(colmask, rows, jnp.float32(0.0)),
                     axis=1, keepdims=True)            # (n_pad, 1)

    tgt = tgt_ref[0, 0]                                # (n_pad, 1)
    msk = msk_ref[0]                                   # (n_pad, 1)
    # mask is 0/1 so |p - t| * m == |p*m - t*m|; padded entries have m == 0.
    num = jnp.sum(jnp.abs(picked - tgt) * msk)         # scalar f32

    out_ref[...] = jnp.broadcast_to(num, out_ref.shape).astype(jnp.float32)


def l1_loss(out, target, ind, mask):
    """
    out    : (b, 2, h, w) float   (NCHW, like PyTorch; kept in native dtype)
    target : (b, n, 2)    float
    ind    : (b, n)       int, values in [0, h*w)
    mask   : (b, n)       0/1
    returns: scalar float32
    """
    b, s, h, w = out.shape
    n = ind.shape[1]
    n_pad = ((n + 127) // 128) * 128
    pad = n_pad - n

    ind_i32 = ind.astype(jnp.int32)
    mask_f32 = mask.astype(jnp.float32)
    tgt_f32 = target.astype(jnp.float32)

    # Cheap index math in the wrapper (no vector integer div in-kernel).
    row = ind_i32 // w
    col = ind_i32 % w

    row_p = jnp.pad(row, ((0, 0), (0, pad)))[..., None]               # (b, n_pad, 1)
    col_p = jnp.pad(col, ((0, 0), (0, pad)))[..., None]               # (b, n_pad, 1)
    msk_p = jnp.pad(mask_f32, ((0, 0), (0, pad)))[..., None]          # (b, n_pad, 1)
    tgt_p = jnp.pad(jnp.transpose(tgt_f32, (0, 2, 1)),
                    ((0, 0), (0, 0), (0, pad)))[..., None]            # (b, s, n_pad, 1)

    partials = pl.pallas_call(
        _l1_loss_kernel,
        out_shape=jax.ShapeDtypeStruct((b, s, 1, 128), jnp.float32),
        grid_spec=pltpu.PrefetchScalarGridSpec(
            num_scalar_prefetch=0,
            grid=(b, s),
            in_specs=[
                # one (batch, channel) map block per grid step, native dtype
                pl.BlockSpec((1, 1, h, w), lambda bi, ci: (bi, ci, 0, 0)),
                pl.BlockSpec((1, n_pad, 1), lambda bi, ci: (bi, 0, 0)),      # row
                pl.BlockSpec((1, n_pad, 1), lambda bi, ci: (bi, 0, 0)),      # col
                pl.BlockSpec((1, 1, n_pad, 1), lambda bi, ci: (bi, ci, 0, 0)),  # tgt
                pl.BlockSpec((1, n_pad, 1), lambda bi, ci: (bi, 0, 0)),      # mask
            ],
            out_specs=pl.BlockSpec((1, 1, 1, 128), lambda bi, ci: (bi, ci, 0, 0)),
        ),
        compiler_params=pltpu.CompilerParams(
            dimension_semantics=("parallel", "parallel"),
        ),
    )(out, row_p, col_p, tgt_p, msk_p)

    num_total = jnp.sum(partials[:, :, 0, 0])
    den_total = jnp.sum(mask_f32)          # denominator == mask.sum(), done in XLA
    return num_total / (den_total + 0.0001)


def _reference_l1_loss(out, target, ind, mask):
    b, s, h, w = out.shape
    n = ind.shape[1]
    maps = jnp.transpose(out.astype(jnp.float32), (0, 2, 3, 1)).reshape(b, h * w, s)
    ind_e = jnp.broadcast_to(ind[:, :, None].astype(jnp.int32), (b, n, s))
    pred = jnp.take_along_axis(maps, ind_e, axis=1)
    m = mask[:, :, None].astype(jnp.float32)
    loss = jnp.sum(jnp.abs(pred * m - target.astype(jnp.float32) * m))
    return loss / (jnp.sum(m) + 0.0001)


if __name__ == "__main__":
    key = jax.random.PRNGKey(0)
    k1, k2, k3, k4 = jax.random.split(key, 4)

    b, s, h, w, n = 2, 2, 16, 16, 8

    out = jax.random.normal(k1, (b, s, h, w), dtype=jnp.float32)
    target = jax.random.normal(k2, (b, n, s), dtype=jnp.float32)
    ind = jax.random.randint(k3, (b, n), 0, h * w, dtype=jnp.int32)
    mask = (jax.random.uniform(k4, (b, n)) > 0.3).astype(jnp.float32)

    loss = l1_loss(out, target, ind, mask)
    jax.block_until_ready(loss)

    ref = _reference_l1_loss(out, target, ind, mask)
    np.testing.assert_allclose(np.asarray(loss), np.asarray(ref),
                               rtol=1e-5, atol=1e-5)
    print("KERNEL_OK")
</pallas_src>

<mosaic_0001>
module attributes {stable_mosaic.version = 11 : i64} {
  func.func @_l1_loss_kernel(%arg0: i32, %arg1: i32, %arg2: memref<1x1x16x16xf32, #tpu.memory_space<vmem>>, %arg3: memref<1x128x1xi32, #tpu.memory_space<vmem>>, %arg4: memref<1x128x1xi32, #tpu.memory_space<vmem>>, %arg5: memref<1x1x128x1xf32, #tpu.memory_space<vmem>>, %arg6: memref<1x128x1xf32, #tpu.memory_space<vmem>>, %arg7: memref<1x1x1x128xf32, #tpu.memory_space<vmem>>) attributes {dimension_semantics = [#tpu.dimension_semantics<parallel>, #tpu.dimension_semantics<parallel>], iteration_bounds = array<i64: 2, 2>, scalar_prefetch = 0 : i64, scratch_operands = 0 : i64, tpu.core_type = #tpu.core_type<tc>, window_params = [{transform_indices = @transform_0, window_bounds = array<i64: 1, 1, 16, 16>}, {transform_indices = @transform_1, window_bounds = array<i64: 1, 128, 1>}, {transform_indices = @transform_2, window_bounds = array<i64: 1, 128, 1>}, {transform_indices = @transform_3, window_bounds = array<i64: 1, 1, 128, 1>}, {transform_indices = @transform_4, window_bounds = array<i64: 1, 128, 1>}, {transform_indices = @transform_5, window_bounds = array<i64: 1, 1, 1, 128>}]} {
    %c0 = arith.constant 0 : index
    %c0_0 = arith.constant 0 : index
    %c0_1 = arith.constant 0 : index
    %0 = vector.load %arg3[%c0, %c0_0, %c0_1] : memref<1x128x1xi32, #tpu.memory_space<vmem>>, vector<1x128x1xi32>
    %1 = vector.shape_cast %0 : vector<1x128x1xi32> to vector<128x1xi32>
    %c0_2 = arith.constant 0 : index
    %c0_3 = arith.constant 0 : index
    %c0_4 = arith.constant 0 : index
    %2 = vector.load %arg4[%c0_2, %c0_3, %c0_4] : memref<1x128x1xi32, #tpu.memory_space<vmem>>, vector<1x128x1xi32>
    %3 = vector.shape_cast %2 : vector<1x128x1xi32> to vector<128x1xi32>
    %4 = tpu.iota {dimensions = array<i32: 1>} : vector<128x16xi32>
    %5 = vector.broadcast %1 : vector<128x1xi32> to vector<128x16xi32>
    %6 = arith.cmpi eq, %4, %5 : vector<128x16xi32>
    %7 = arith.extui %6 : vector<128x16xi1> to vector<128x16xi32>
    %8 = arith.sitofp %7 : vector<128x16xi32> to vector<128x16xf32>
    %c0_5 = arith.constant 0 : index
    %c0_6 = arith.constant 0 : index
    %c0_7 = arith.constant 0 : index
    %c0_8 = arith.constant 0 : index
    %9 = vector.load %arg2[%c0_5, %c0_6, %c0_7, %c0_8] : memref<1x1x16x16xf32, #tpu.memory_space<vmem>>, vector<1x1x16x16xf32>
    %10 = vector.shape_cast %9 : vector<1x1x16x16xf32> to vector<16x16xf32>
    %cst = arith.constant dense<0.000000e+00> : vector<128x16xf32>
    %11 = tpu.matmul %8, %10, %cst {dimension_numbers = #tpu.dot_dimension_numbers<[1], [0], [0], [1], [0, 0, 1, 1], [], []>} : vector<128x16xf32>, vector<16x16xf32>, vector<128x16xf32> -> vector<128x16xf32>
    %12 = tpu.iota {dimensions = array<i32: 1>} : vector<128x16xi32>
    %13 = vector.broadcast %3 : vector<128x1xi32> to vector<128x16xi32>
    %14 = arith.cmpi eq, %12, %13 : vector<128x16xi32>
    %cst_9 = arith.constant 0.000000e+00 : f32
    %15 = vector.broadcast %cst_9 : f32 to vector<128x16xf32>
    %16 = arith.select %14, %11, %15 : vector<128x16xi1>, vector<128x16xf32>
    %cst_10 = arith.constant dense<0.000000e+00> : vector<128xf32>
    %17 = vector.multi_reduction <add>, %16, %cst_10 [1] : vector<128x16xf32> to vector<128xf32>
    %18 = vector.shape_cast %17 : vector<128xf32> to vector<128x1xf32>
    %c0_11 = arith.constant 0 : index
    %c0_12 = arith.constant 0 : index
    %c0_13 = arith.constant 0 : index
    %c0_14 = arith.constant 0 : index
    %19 = vector.load %arg5[%c0_11, %c0_12, %c0_13, %c0_14] : memref<1x1x128x1xf32, #tpu.memory_space<vmem>>, vector<1x1x128x1xf32>
    %20 = vector.shape_cast %19 : vector<1x1x128x1xf32> to vector<128x1xf32>
    %c0_15 = arith.constant 0 : index
    %c0_16 = arith.constant 0 : index
    %c0_17 = arith.constant 0 : index
    %21 = vector.load %arg6[%c0_15, %c0_16, %c0_17] : memref<1x128x1xf32, #tpu.memory_space<vmem>>, vector<1x128x1xf32>
    %22 = vector.shape_cast %21 : vector<1x128x1xf32> to vector<128x1xf32>
    %23 = arith.subf %18, %20 : vector<128x1xf32>
    %24 = math.absf %23 : vector<128x1xf32>
    %25 = arith.mulf %24, %22 : vector<128x1xf32>
    %26 = vector.shape_cast %25 : vector<128x1xf32> to vector<1x128x1xf32>
    %cst_18 = arith.constant dense<0.000000e+00> : vector<1xf32>
    %27 = vector.multi_reduction <add>, %26, %cst_18 [1, 2] : vector<1x128x1xf32> to vector<1xf32>
    %28 = vector.shape_cast %27 : vector<1xf32> to vector<1x1x1xf32>
    %29 = vector.extract %28[0, 0, 0] : f32 from vector<1x1x1xf32>
    %30 = vector.broadcast %29 : f32 to vector<1x1x1x128xf32>
    %c0_19 = arith.constant 0 : index
    %c0_20 = arith.constant 0 : index
    %c0_21 = arith.constant 0 : index
    %c0_22 = arith.constant 0 : index
    %31 = vector.load %arg7[%c0_19, %c0_20, %c0_21, %c0_22] : memref<1x1x1x128xf32, #tpu.memory_space<vmem>>, vector<1x1x1x128xf32>
    tpu.vector_store %arg7[%c0_19, %c0_20, %c0_21, %c0_22], %30 {strides = array<i32>} : memref<1x1x1x128xf32, #tpu.memory_space<vmem>>, vector<1x1x1x128xf32>,
    return
  }
  func.func @transform_0(%arg0: i32, %arg1: i32) -> (i32, i32, i32, i32) {
    %c0_i32 = arith.constant 0 : i32
    %c0_i32_0 = arith.constant 0 : i32
    %c0_i32_1 = arith.constant 0 : i32
    return %arg0, %arg1, %c0_i32, %c0_i32_0 : i32, i32, i32, i32
  }
  func.func @transform_1(%arg0: i32, %arg1: i32) -> (i32, i32, i32) {
    %c0_i32 = arith.constant 0 : i32
    %c0_i32_0 = arith.constant 0 : i32
    %c0_i32_1 = arith.constant 0 : i32
    return %arg0, %c0_i32, %c0_i32_0 : i32, i32, i32
  }
  func.func @transform_2(%arg0: i32, %arg1: i32) -> (i32, i32, i32) {
    %c0_i32 = arith.constant 0 : i32
    %c0_i32_0 = arith.constant 0 : i32
    %c0_i32_1 = arith.constant 0 : i32
    return %arg0, %c0_i32, %c0_i32_0 : i32, i32, i32
  }
  func.func @transform_3(%arg0: i32, %arg1: i32) -> (i32, i32, i32, i32) {
    %c0_i32 = arith.constant 0 : i32
    %c0_i32_0 = arith.constant 0 : i32
    %c0_i32_1 = arith.constant 0 : i32
    return %arg0, %arg1, %c0_i32, %c0_i32_0 : i32, i32, i32, i32
  }
  func.func @transform_4(%arg0: i32, %arg1: i32) -> (i32, i32, i32) {
    %c0_i32 = arith.constant 0 : i32
    %c0_i32_0 = arith.constant 0 : i32
    %c0_i32_1 = arith.constant 0 : i32
    return %arg0, %c0_i32, %c0_i32_0 : i32, i32, i32
  }
  func.func @transform_5(%arg0: i32, %arg1: i32) -> (i32, i32, i32, i32) {
    %c0_i32 = arith.constant 0 : i32
    %c0_i32_0 = arith.constant 0 : i32
    %c0_i32_1 = arith.constant 0 : i32
    return %arg0, %arg1, %c0_i32, %c0_i32_0 : i32, i32, i32, i32
  }
}

</mosaic_0001>

<llo_original>
// kernel: tpu_custom_call.1
$region0: #{tpu_custom_call.1}
  #allocation0 [shape = 'u32[]', space=smem, size = 0x4, offset = 0x4, fixed_abs, tag = 'smem constant byte address 0x4 - core index']
  #allocation1 [shape = 'u32[144,128]{1,0:T(1,128)}', space=vmem, size = 0x12000, scoped, tag = 'internal scratch']
  %s0 = inlined_call_operand.vmem [shape: f32[2,2,16,16], index: 0, kind: input, shape index: {}]
  %s1 = inlined_call_operand.vmem [shape: s32[2,128,1], index: 1, kind: input, shape index: {}]
  %s2 = inlined_call_operand.vmem [shape: s32[2,128,1], index: 2, kind: input, shape index: {}]
  %s3 = inlined_call_operand.vmem [shape: f32[2,2,128,1], index: 3, kind: input, shape index: {}]
  %s4 = inlined_call_operand.vmem [shape: f32[2,128,1], index: 4, kind: input, shape index: {}]
  %s5 = inlined_call_operand.hbm [shape: f32[2,2,1,128], index: 5, kind: output, shape index: {}]
  %s6 = sld [smem:[#allocation0]]
  $region53: #{tpu_custom_call.1} parent=0
    _
  %s8 = ssub.s32 1, %s6
  %s9 = scalar_select 0, %s8, %s6
  $region1: #{tpu_custom_call.1} parent=0
    #allocation2 [shape = 'u8[1024]{0}', space=vmem, size = 0x400, scoped, tag = 'output window, operand 0']
    #allocation3 [shape = 's32[2]{0}', space=sflag, size = 0x8, scoped, tag = 'scoped memory for tpu_custom_call.1']
    %10 = vsyncpa [#allocation3], 0
    %s11 = scalar_lea.sflag [#allocation3], 1
    %12 = vsyncpa %s11, 0
    loop: start=0, step=1, limit=6
    $region2: #{tpu_custom_call.1} parent=1 // loop_pre_header
      _
    $region3: #{tpu_custom_call.1} parent=1 // loop_header
      %s14 = sphi 0, %s18
      %p15 = scmp.ge.s32.totalorder %s14, 6
      %s21 = sphi 0, %s33
      %s22 = sphi 0, %s29
      %s23 = sphi 0, %s21
      %s24 = sphi 0, %s22
      %s25 = sphi 0, %s23
      %s26 = sphi 0, %s24
      %s38 = sphi 0, %s40
      %s41 = sphi 0, %s38
      %s42 = sphi 0, %s41
      %s58 = sphi 0, %s42
      %s64 = sphi 0, %s66
      %s67 = sphi 0, %s64
      %s68 = sphi 0, %s67
      %s84 = sphi 0, %s68
      %s90 = sphi 0, %s92
      %s93 = sphi 0, %s90
      %s94 = sphi 0, %s93
      %s110 = sphi 0, %s94
      %s118 = sphi 0, %s120
      %s121 = sphi 0, %s118
      %s122 = sphi 0, %s121
      %s138 = sphi 0, %s122
      %s144 = sphi 0, %s146
      %s147 = sphi 0, %s144
      %s148 = sphi 0, %s147
      %s164 = sphi 0, %s148
      %s172 = sphi 0, %s174
      %s175 = sphi 0, %s172
      %s176 = sphi 0, %s175
      %s192 = sphi 0, %s176
    $region4: #{tpu_custom_call.1} parent=1 // loop_header_branch
      %17 = sbr.rel (%p15) target = $region8
    $region5: #{tpu_custom_call.1} parent=1 // loop_body
      %s19 = ssub.s32 %s14, 1
      %s20 = ssub.s32 %s14, 2
      %s27 = sadd.s32 1, %s22
      %p28 = scmp.ge.s32.totalorder %s27, 2
      %s29 = scalar_select %p28, 0, %s27
      %s30 = sadd.s32 1, %s21
      %s31 = scalar_select %p28, %s30, %s21
      %p32 = scmp.ge.s32.totalorder %s31, 2
      %s33 = scalar_select %p32, 0, %s31
      %s34 = ssub.s32 %s21, %s33
      %s35 = ssub.s32 %s22, %s29
      %s36 = sor.u32 %s34, %s35
      %p37 = scmp.eq.s32.totalorder %s36, 0
      %s39 = sadd.s32 %s38, 1
      %s40 = scalar_select %p37, %s38, %s39
      %p43 = pneg %p37
      %p44 = scmp.eq.s32.totalorder %s14, 3
      %p45 = por %p43, %p44
      %p46 = scmp.ne.s32.totalorder %s38, %s41
      %p47 = scmp.eq.s32.totalorder %s14, 0
      %p48 = por %p46, %p47
      %p49 = scmp.ne.s32.totalorder %s38, %s41
      %p50 = scmp.eq.s32.totalorder %s19, 3
      %p51 = por %p49, %p50
      %p52 = scmp.ne.s32.totalorder %s41, %s42
      %p53 = scmp.eq.s32.totalorder %s19, 0
      %p54 = por %p52, %p53
      %p55 = scmp.ne.s32.totalorder %s41, %s42
      %p56 = scmp.eq.s32.totalorder %s20, 3
      %p57 = por %p55, %p56
      %p59 = scmp.ne.s32.totalorder %s42, %s58
      %p60 = scmp.eq.s32.totalorder %s20, 0
      %p61 = por %p59, %p60
      %s62 = ssub.s32 %s21, %s33
      %p63 = scmp.eq.s32.totalorder %s62, 0
      %s65 = sadd.s32 %s64, 1
      %s66 = scalar_select %p63, %s64, %s65
      %p69 = pneg %p63
      %p70 = scmp.eq.s32.totalorder %s14, 3
      %p71 = por %p69, %p70
      %p72 = scmp.ne.s32.totalorder %s64, %s67
      %p73 = scmp.eq.s32.totalorder %s14, 0
      %p74 = por %p72, %p73
      %p75 = scmp.ne.s32.totalorder %s64, %s67
      %p76 = scmp.eq.s32.totalorder %s19, 3
      %p77 = por %p75, %p76
      %p78 = scmp.ne.s32.totalorder %s67, %s68
      %p79 = scmp.eq.s32.totalorder %s19, 0
      %p80 = por %p78, %p79
      %p81 = scmp.ne.s32.totalorder %s67, %s68
      %p82 = scmp.eq.s32.totalorder %s20, 3
      %p83 = por %p81, %p82
      %p85 = scmp.ne.s32.totalorder %s68, %s84
      %p86 = scmp.eq.s32.totalorder %s20, 0
      %p87 = por %p85, %p86
      %s88 = ssub.s32 %s21, %s33
      %p89 = scmp.eq.s32.totalorder %s88, 0
      %s91 = sadd.s32 %s90, 1
      %s92 = scalar_select %p89, %s90, %s91
      %p95 = pneg %p89
      %p96 = scmp.eq.s32.totalorder %s14, 3
      %p97 = por %p95, %p96
      %p98 = scmp.ne.s32.totalorder %s90, %s93
      %p99 = scmp.eq.s32.totalorder %s14, 0
      %p100 = por %p98, %p99
      %p101 = scmp.ne.s32.totalorder %s90, %s93
      %p102 = scmp.eq.s32.totalorder %s19, 3
      %p103 = por %p101, %p102
      %p104 = scmp.ne.s32.totalorder %s93, %s94
      %p105 = scmp.eq.s32.totalorder %s19, 0
      %p106 = por %p104, %p105
      %p107 = scmp.ne.s32.totalorder %s93, %s94
      %p108 = scmp.eq.s32.totalorder %s20, 3
      %p109 = por %p107, %p108
      %p111 = scmp.ne.s32.totalorder %s94, %s110
      %p112 = scmp.eq.s32.totalorder %s20, 0
      %p113 = por %p111, %p112
      %s114 = ssub.s32 %s21, %s33
      %s115 = ssub.s32 %s22, %s29
      %s116 = sor.u32 %s114, %s115
      %p117 = scmp.eq.s32.totalorder %s116, 0
      %s119 = sadd.s32 %s118, 1
      %s120 = scalar_select %p117, %s118, %s119
      %p123 = pneg %p117
      %p124 = scmp.eq.s32.totalorder %s14, 3
      %p125 = por %p123, %p124
      %p126 = scmp.ne.s32.totalorder %s118, %s121
      %p127 = scmp.eq.s32.totalorder %s14, 0
      %p128 = por %p126, %p127
      %p129 = scmp.ne.s32.totalorder %s118, %s121
      %p130 = scmp.eq.s32.totalorder %s19, 3
      %p131 = por %p129, %p130
      %p132 = scmp.ne.s32.totalorder %s121, %s122
      %p133 = scmp.eq.s32.totalorder %s19, 0
      %p134 = por %p132, %p133
      %p135 = scmp.ne.s32.totalorder %s121, %s122
      %p136 = scmp.eq.s32.totalorder %s20, 3
      %p137 = por %p135, %p136
      %p139 = scmp.ne.s32.totalorder %s122, %s138
      %p140 = scmp.eq.s32.totalorder %s20, 0
      %p141 = por %p139, %p140
      %s142 = ssub.s32 %s21, %s33
      %p143 = scmp.eq.s32.totalorder %s142, 0
      %s145 = sadd.s32 %s144, 1
      %s146 = scalar_select %p143, %s144, %s145
      %p149 = pneg %p143
      %p150 = scmp.eq.s32.totalorder %s14, 3
      %p151 = por %p149, %p150
      %p152 = scmp.ne.s32.totalorder %s144, %s147
      %p153 = scmp.eq.s32.totalorder %s14, 0
      %p154 = por %p152, %p153
      %p155 = scmp.ne.s32.totalorder %s144, %s147
      %p156 = scmp.eq.s32.totalorder %s19, 3
      %p157 = por %p155, %p156
      %p158 = scmp.ne.s32.totalorder %s147, %s148
      %p159 = scmp.eq.s32.totalorder %s19, 0
      %p160 = por %p158, %p159
      %p161 = scmp.ne.s32.totalorder %s147, %s148
      %p162 = scmp.eq.s32.totalorder %s20, 3
      %p163 = por %p161, %p162
      %p165 = scmp.ne.s32.totalorder %s148, %s164
      %p166 = scmp.eq.s32.totalorder %s20, 0
      %p167 = por %p165, %p166
      %s168 = ssub.s32 %s21, %s33
      %s169 = ssub.s32 %s22, %s29
      %s170 = sor.u32 %s168, %s169
      %p171 = scmp.eq.s32.totalorder %s170, 0
      %s173 = sadd.s32 %s172, 1
      %s174 = scalar_select %p171, %s172, %s173
      %p177 = pneg %p171
      %p178 = scmp.eq.s32.totalorder %s14, 3
      %p179 = por %p177, %p178
      %p180 = scmp.ne.s32.totalorder %s172, %s175
      %p181 = scmp.eq.s32.totalorder %s14, 0
      %p182 = por %p180, %p181
      %p183 = scmp.ne.s32.totalorder %s172, %s175
      %p184 = scmp.eq.s32.totalorder %s19, 3
      %p185 = por %p183, %p184
      %p186 = scmp.ne.s32.totalorder %s175, %s176
      %p187 = scmp.eq.s32.totalorder %s19, 0
      %p188 = por %p186, %p187
      %p189 = scmp.ne.s32.totalorder %s175, %s176
      %p190 = scmp.eq.s32.totalorder %s20, 3
      %p191 = por %p189, %p190
      %p193 = scmp.ne.s32.totalorder %s176, %s192
      %p194 = scmp.eq.s32.totalorder %s20, 0
      %p195 = por %p193, %p194
      %p196 = scmp.le.s32.totalorder 1, %s14
      %p197 = scmp.lt.s32.totalorder %s14, 5
      %p198 = pnand %p196, %p197
      %p199 = pneg %p198
      // Predicated region
      $region9: #{tpu_custom_call.1} parent=5 // pred_check
        _
      $region10: #{tpu_custom_call.1} parent=5 // pred_check_branch
        %201 = sbr.rel (%p198) target = $region12
      $region11: #{tpu_custom_call.1} parent=5 // pred_region
        %s202 = ssub.s32 %s14, 1
      $region12: #{tpu_custom_call.1} parent=5 // pred_fallthru
        _
      %p203 = scmp.lt.s32.totalorder %s14, 4
      // Predicated region
      $region13: #{tpu_custom_call.1} parent=5 // pred_check
        %p204 = pneg %p203
      $region14: #{tpu_custom_call.1} parent=5 // pred_check_branch
        %206 = sbr.rel (%p204) target = $region16
      $region15: #{tpu_custom_call.1} parent=5 // pred_region
        // Predicated region
        $region17: #{tpu_custom_call.1} parent=15 // pred_check
          %p207 = pneg %p48
        $region18: #{tpu_custom_call.1} parent=15 // pred_check_branch
          %209 = sbr.rel (%p207) target = $region20
        $region19: #{tpu_custom_call.1} parent=15 // pred_region
          %p210 = scmp.lt.s32.totalorder %s21, 1
          %s211 = scalar_select %p210, %s21, 1
          %p212 = scmp.lt.s32.totalorder %s22, 1
          %s213 = scalar_select %p212, %s22, 1
          %s214 = smul.addr %s213, 2
          %s215 = smul.addr %s211, 4
          %s216 = sadd.s32 %s214, %s215
          %s217 = smul.addr %s216, 8
          %s218 = scalar_lea.vmem %s0, %s217
        $region20: #{tpu_custom_call.1} parent=15 // pred_fallthru
          _
        // Predicated region
        $region21: #{tpu_custom_call.1} parent=15 // pred_check
          %p219 = pneg %p74
        $region22: #{tpu_custom_call.1} parent=15 // pred_check_branch
          %221 = sbr.rel (%p219) target = $region24
        $region23: #{tpu_custom_call.1} parent=15 // pred_region
          %p222 = scmp.lt.s32.totalorder %s21, 1
          %s223 = scalar_select %p222, %s21, 1
          %s224 = smul.addr %s223, 16
          %s225 = smul.addr %s224, 8
          %s226 = scalar_lea.vmem %s1, %s225
        $region24: #{tpu_custom_call.1} parent=15 // pred_fallthru
          _
        // Predicated region
        $region25: #{tpu_custom_call.1} parent=15 // pred_check
          %p227 = pneg %p100
        $region26: #{tpu_custom_call.1} parent=15 // pred_check_branch
          %229 = sbr.rel (%p227) target = $region28
        $region27: #{tpu_custom_call.1} parent=15 // pred_region
          %p230 = scmp.lt.s32.totalorder %s21, 1
          %s231 = scalar_select %p230, %s21, 1
          %s232 = smul.addr %s231, 16
          %s233 = smul.addr %s232, 8
          %s234 = scalar_lea.vmem %s2, %s233
        $region28: #{tpu_custom_call.1} parent=15 // pred_fallthru
          _
        // Predicated region
        $region29: #{tpu_custom_call.1} parent=15 // pred_check
          %p235 = pneg %p128
        $region30: #{tpu_custom_call.1} parent=15 // pred_check_branch
          %237 = sbr.rel (%p235) target = $region32
        $region31: #{tpu_custom_call.1} parent=15 // pred_region
          %p238 = scmp.lt.s32.totalorder %s21, 1
          %s239 = scalar_select %p238, %s21, 1
          %p240 = scmp.lt.s32.totalorder %s22, 1
          %s241 = scalar_select %p240, %s22, 1
          %s242 = smul.addr %s241, 16
          %s243 = smul.addr %s239, 32
          %s244 = sadd.s32 %s242, %s243
          %s245 = smul.addr %s244, 8
          %s246 = scalar_lea.vmem %s3, %s245
        $region32: #{tpu_custom_call.1} parent=15 // pred_fallthru
          _
        // Predicated region
        $region33: #{tpu_custom_call.1} parent=15 // pred_check
          %p247 = pneg %p154
        $region34: #{tpu_custom_call.1} parent=15 // pred_check_branch
          %249 = sbr.rel (%p247) target = $region36
        $region35: #{tpu_custom_call.1} parent=15 // pred_region
          %p250 = scmp.lt.s32.totalorder %s21, 1
          %s251 = scalar_select %p250, %s21, 1
          %s252 = smul.addr %s251, 16
          %s253 = smul.addr %s252, 8
          %s254 = scalar_lea.vmem %s4, %s253
        $region36: #{tpu_custom_call.1} parent=15 // pred_fallthru
          _
      $region16: #{tpu_custom_call.1} parent=5 // pred_fallthru
        _
      %p255 = scmp.le.s32.totalorder 1, %s14
      %p256 = scmp.lt.s32.totalorder %s14, 5
      %p257 = pnand %p255, %p256
      %p258 = pneg %p257
      // Predicated region
      $region37: #{tpu_custom_call.1} parent=5 // pred_check
        _
      $region38: #{tpu_custom_call.1} parent=5 // pred_check_branch
        %260 = sbr.rel (%p257) target = $region40
      $region39: #{tpu_custom_call.1} parent=5 // pred_region
        %s261 = ssub.s32 %s14, 1
        %p262 = scmp.lt.s32.totalorder %s23, 1
        %s263 = scalar_select %p262, %s23, 1
        %p264 = scmp.lt.s32.totalorder %s24, 1
        %s265 = scalar_select %p264, %s24, 1
        %s266 = smul.addr %s265, 2
        %s267 = smul.addr %s263, 4
        %s268 = sadd.s32 %s266, %s267
        %s269 = smul.addr %s268, 8
        %s270 = scalar_lea.vmem %s0, %s269
        %p271 = pneg %p54
        %p272 = pneg %p51
        %p273 = scmp.lt.s32.totalorder %s23, 1
        %s274 = scalar_select %p273, %s23, 1
        %s275 = smul.addr %s274, 16
        %s276 = smul.addr %s275, 8
        %s277 = scalar_lea.vmem %s1, %s276
        %p278 = pneg %p80
        %p279 = pneg %p77
        %p280 = scmp.lt.s32.totalorder %s23, 1
        %s281 = scalar_select %p280, %s23, 1
        %s282 = smul.addr %s281, 16
        %s283 = smul.addr %s282, 8
        %s284 = scalar_lea.vmem %s2, %s283
        %p285 = pneg %p106
        %p286 = pneg %p103
        %p287 = scmp.lt.s32.totalorder %s23, 1
        %s288 = scalar_select %p287, %s23, 1
        %p289 = scmp.lt.s32.totalorder %s24, 1
        %s290 = scalar_select %p289, %s24, 1
        %s291 = smul.addr %s290, 16
        %s292 = smul.addr %s288, 32
        %s293 = sadd.s32 %s291, %s292
        %s294 = smul.addr %s293, 8
        %s295 = scalar_lea.vmem %s3, %s294
        %p296 = pneg %p134
        %p297 = pneg %p131
        %p298 = scmp.lt.s32.totalorder %s23, 1
        %s299 = scalar_select %p298, %s23, 1
        %s300 = smul.addr %s299, 16
        %s301 = smul.addr %s300, 8
        %s302 = scalar_lea.vmem %s4, %s301
        %p303 = pneg %p160
        %p304 = pneg %p157
        %p305 = pneg %p188
        %p306 = pneg %p185
        %s307 = sand.u32 %s175, 1
        %s308 = scalar_lea.sflag [#allocation3], %s307
        %s309 = sand.u32 %s175, 1
        %s310 = scalar_lea.vmem [#allocation2], %s309
        %p311 = scmp.lt.s32.totalorder %s23, 1
        %s312 = scalar_select %p311, %s23, 1
        %p313 = scmp.lt.s32.totalorder %s24, 1
        %s314 = scalar_select %p313, %s24, 1
        %s315 = smul.addr %s314, 2
        %s316 = smul.addr %s312, 4
        %s317 = sadd.s32 %s315, %s316
        %s318 = smul.addr %s317, 8
        %s319 = scalar_lea.vmem %s0, %s318
        %p320 = scmp.lt.s32.totalorder %s23, 1
        %s321 = scalar_select %p320, %s23, 1
        %s322 = smul.addr %s321, 16
        %s323 = smul.addr %s322, 8
        %s324 = scalar_lea.vmem %s1, %s323
        %p325 = scmp.lt.s32.totalorder %s23, 1
        %s326 = scalar_select %p325, %s23, 1
        %s327 = smul.addr %s326, 16
        %s328 = smul.addr %s327, 8
        %s329 = scalar_lea.vmem %s2, %s328
        %p330 = scmp.lt.s32.totalorder %s23, 1
        %s331 = scalar_select %p330, %s23, 1
        %p332 = scmp.lt.s32.totalorder %s24, 1
        %s333 = scalar_select %p332, %s24, 1
        %s334 = smul.addr %s333, 16
        %s335 = smul.addr %s331, 32
        %s336 = sadd.s32 %s334, %s335
        %s337 = smul.addr %s336, 8
        %s338 = scalar_lea.vmem %s3, %s337
        %p339 = scmp.lt.s32.totalorder %s23, 1
        %s340 = scalar_select %p339, %s23, 1
        %s341 = smul.addr %s340, 16
        %s342 = smul.addr %s341, 8
        %s343 = scalar_lea.vmem %s4, %s342
        %v344 = vld [vmem:[%s324] sm:$0xff]
        %v345 = vld [vmem:[%s324 + $0x8] sm:$0xff]
        %v346 = vld [vmem:[%s324 + $0x10] sm:$0xff]
        %v347 = vld [vmem:[%s324 + $0x18] sm:$0xff]
        %v348 = vld [vmem:[%s324 + $0x20] sm:$0xff]
        %v349 = vld [vmem:[%s324 + $0x28] sm:$0xff]
        %v350 = vld [vmem:[%s324 + $0x30] sm:$0xff]
        %v351 = vld [vmem:[%s324 + $0x38] sm:$0xff]
        %v352 = vld [vmem:[%s324 + $0x40] sm:$0xff]
        %v353 = vld [vmem:[%s324 + $0x48] sm:$0xff]
        %v354 = vld [vmem:[%s324 + $0x50] sm:$0xff]
        %v355 = vld [vmem:[%s324 + $0x58] sm:$0xff]
        %v356 = vld [vmem:[%s324 + $0x60] sm:$0xff]
        %v357 = vld [vmem:[%s324 + $0x68] sm:$0xff]
        %v358 = vld [vmem:[%s324 + $0x70] sm:$0xff]
        %v359 = vld [vmem:[%s324 + $0x78] sm:$0xff]
        %v360 = vld [vmem:[%s329] sm:$0xff]
        %v361 = vld [vmem:[%s329 + $0x8] sm:$0xff]
        %v362 = vld [vmem:[%s329 + $0x10] sm:$0xff]
        %v363 = vld [vmem:[%s329 + $0x18] sm:$0xff]
        %v364 = vld [vmem:[%s329 + $0x20] sm:$0xff]
        %v365 = vld [vmem:[%s329 + $0x28] sm:$0xff]
        %v366 = vld [vmem:[%s329 + $0x30] sm:$0xff]
        %v367 = vld [vmem:[%s329 + $0x38] sm:$0xff]
        %v368 = vld [vmem:[%s329 + $0x40] sm:$0xff]
        %v369 = vld [vmem:[%s329 + $0x48] sm:$0xff]
        %v370 = vld [vmem:[%s329 + $0x50] sm:$0xff]
        %v371 = vld [vmem:[%s329 + $0x58] sm:$0xff]
        %v372 = vld [vmem:[%s329 + $0x60] sm:$0xff]
        %v373 = vld [vmem:[%s329 + $0x68] sm:$0xff]
        %v374 = vld [vmem:[%s329 + $0x70] sm:$0xff]
        %v375 = vld [vmem:[%s329 + $0x78] sm:$0xff]
        %v376 = vlaneseq
        %v377 = vand.u32 %v376, 127
        %378 = vset.pattern.permute.xlu0 0
        %379 = vperm.xlu0 %378, %v344
        %v380 = vpop.permute.xlu0 %379
        %381 = vset.pattern.permute.xlu0 0
        %382 = vperm.xlu0 %381, %v345
        %v383 = vpop.permute.xlu0 %382
        %384 = vset.pattern.permute.xlu0 0
        %385 = vperm.xlu0 %384, %v346
        %v386 = vpop.permute.xlu0 %385
        %387 = vset.pattern.permute.xlu0 0
        %388 = vperm.xlu0 %387, %v347
        %v389 = vpop.permute.xlu0 %388
        %390 = vset.pattern.permute.xlu0 0
        %391 = vperm.xlu0 %390, %v348
        %v392 = vpop.permute.xlu0 %391
        %393 = vset.pattern.permute.xlu0 0
        %394 = vperm.xlu0 %393, %v349
        %v395 = vpop.permute.xlu0 %394
        %396 = vset.pattern.permute.xlu0 0
        %397 = vperm.xlu0 %396, %v350
        %v398 = vpop.permute.xlu0 %397
        %399 = vset.pattern.permute.xlu0 0
        %400 = vperm.xlu0 %399, %v351
        %v401 = vpop.permute.xlu0 %400
        %402 = vset.pattern.permute.xlu0 0
        %403 = vperm.xlu0 %402, %v352
        %v404 = vpop.permute.xlu0 %403
        %405 = vset.pattern.permute.xlu0 0
        %406 = vperm.xlu0 %405, %v353
        %v407 = vpop.permute.xlu0 %406
        %408 = vset.pattern.permute.xlu0 0
        %409 = vperm.xlu0 %408, %v354
        %v410 = vpop.permute.xlu0 %409
        %411 = vset.pattern.permute.xlu0 0
        %412 = vperm.xlu0 %411, %v355
        %v413 = vpop.permute.xlu0 %412
        %414 = vset.pattern.permute.xlu0 0
        %415 = vperm.xlu0 %414, %v356
        %v416 = vpop.permute.xlu0 %415
        %417 = vset.pattern.permute.xlu0 0
        %418 = vperm.xlu0 %417, %v357
        %v419 = vpop.permute.xlu0 %418
        %420 = vset.pattern.permute.xlu0 0
        %421 = vperm.xlu0 %420, %v358
        %v422 = vpop.permute.xlu0 %421
        %423 = vset.pattern.permute.xlu0 0
        %424 = vperm.xlu0 %423, %v359
        %v425 = vpop.permute.xlu0 %424
        %vm426 = vcmp.eq.s32.totalorder %v377, %v380
        %vm427 = vcmp.eq.s32.totalorder %v377, %v383
        %vm428 = vcmp.eq.s32.totalorder %v377, %v386
        %vm429 = vcmp.eq.s32.totalorder %v377, %v389
        %vm430 = vcmp.eq.s32.totalorder %v377, %v392
        %vm431 = vcmp.eq.s32.totalorder %v377, %v395
        %vm432 = vcmp.eq.s32.totalorder %v377, %v398
        %vm433 = vcmp.eq.s32.totalorder %v377, %v401
        %vm434 = vcmp.eq.s32.totalorder %v377, %v404
        %vm435 = vcmp.eq.s32.totalorder %v377, %v407
        %vm436 = vcmp.eq.s32.totalorder %v377, %v410
        %vm437 = vcmp.eq.s32.totalorder %v377, %v413
        %vm438 = vcmp.eq.s32.totalorder %v377, %v416
        %vm439 = vcmp.eq.s32.totalorder %v377, %v419
        %vm440 = vcmp.eq.s32.totalorder %v377, %v422
        %vm441 = vcmp.eq.s32.totalorder %v377, %v425
        %v442 = vsel %vm426, 1, 0
        %v443 = vsel %vm427, 1, 0
        %v444 = vsel %vm428, 1, 0
        %v445 = vsel %vm429, 1, 0
        %v446 = vsel %vm430, 1, 0
        %v447 = vsel %vm431, 1, 0
        %v448 = vsel %vm432, 1, 0
        %v449 = vsel %vm433, 1, 0
        %v450 = vsel %vm434, 1, 0
        %v451 = vsel %vm435, 1, 0
        %v452 = vsel %vm436, 1, 0
        %v453 = vsel %vm437, 1, 0
        %v454 = vsel %vm438, 1, 0
        %v455 = vsel %vm439, 1, 0
        %v456 = vsel %vm440, 1, 0
        %v457 = vsel %vm441, 1, 0
        %v458 = vcvt.s32.f32 %v442
        %v459 = vcvt.s32.f32 %v443
        %v460 = vcvt.s32.f32 %v444
        %v461 = vcvt.s32.f32 %v445
        %v462 = vcvt.s32.f32 %v446
        %v463 = vcvt.s32.f32 %v447
        %v464 = vcvt.s32.f32 %v448
        %v465 = vcvt.s32.f32 %v449
        %v466 = vcvt.s32.f32 %v450
        %v467 = vcvt.s32.f32 %v451
        %v468 = vcvt.s32.f32 %v452
        %v469 = vcvt.s32.f32 %v453
        %v470 = vcvt.s32.f32 %v454
        %v471 = vcvt.s32.f32 %v455
        %v472 = vcvt.s32.f32 %v456
        %v473 = vcvt.s32.f32 %v457
        %v474 = vld [vmem:[%s319] sm:$0xff]
        %v475 = vld [vmem:[%s319 + $0x8] sm:$0xff]
        %vm476 = vcmask 130048
        %v478 = vsel %vm476, %v458, 0
        %v481 = vsel %vm476, %v459, 0
        %v484 = vsel %vm476, %v460, 0
        %v487 = vsel %vm476, %v461, 0
        %v490 = vsel %vm476, %v462, 0
        %v493 = vsel %vm476, %v463, 0
        %v496 = vsel %vm476, %v464, 0
        %v499 = vsel %vm476, %v465, 0
        %v502 = vsel %vm476, %v466, 0
        %v505 = vsel %vm476, %v467, 0
        %v508 = vsel %vm476, %v468, 0
        %v511 = vsel %vm476, %v469, 0
        %v514 = vsel %vm476, %v470, 0
        %v517 = vsel %vm476, %v471, 0
        %v520 = vsel %vm476, %v472, 0
        %v523 = vsel %vm476, %v473, 0
        %525 = vmatprep.subr.mxu0 0.0
        %526 = vmatpush1.msra.mxu0 %v474
        %527 = vmatprep.subr.mxu0 0.0
        %528 = vmatpush1.msra.mxu0 %v475
        %529 = vmatprep.subr.mxu0 0.0
        %530 = vmatpush1.msra.mxu0 0.0
        %531 = vmatprep.subr.mxu0 0.0
        %532 = vmatpush1.msra.mxu0 0.0
        %533 = vmatprep.subr.mxu0 0.0
        %534 = vmatpush1.msra.mxu0 0.0
        %535 = vmatprep.subr.mxu0 0.0
        %536 = vmatpush1.msra.mxu0 0.0
        %537 = vmatprep.subr.mxu0 0.0
        %538 = vmatpush1.msra.mxu0 0.0
        %539 = vmatprep.subr.mxu0 0.0
        %540 = vmatpush1.msra.mxu0 0.0
        %541 = vmatprep.subr.mxu0 0.0
        %542 = vmatpush1.msra.mxu0 0.0
        %543 = vmatprep.subr.mxu0 0.0
        %544 = vmatpush1.msra.mxu0 0.0
        %545 = vmatprep.subr.mxu0 0.0
        %546 = vmatpush1.msra.mxu0 0.0
        %547 = vmatprep.subr.mxu0 0.0
        %548 = vmatpush1.msra.mxu0 0.0
        %549 = vmatprep.subr.mxu0 0.0
        %550 = vmatpush1.msra.mxu0 0.0
        %551 = vmatprep.subr.mxu0 0.0
        %552 = vmatpush1.msra.mxu0 0.0
        %553 = vmatprep.subr.mxu0 0.0
        %554 = vmatpush1.msra.mxu0 0.0
        %555 = vmatprep.subr.mxu0 0.0
        %556 = vmatpush1.msra.mxu0 0.0
        %557 = vmatprep.subr.mxu0 0.0
        %558 = vmatpush1.msra.mxu0 0.0
        %559 = vmatprep.subr.mxu0 0.0
        %560 = vmatpush1.msra.mxu0 0.0
        %561 = vmatprep.subr.mxu0 0.0
        %562 = vmatpush1.msra.mxu0 0.0
        %563 = vmatprep.subr.mxu0 0.0
        %564 = vmatpush1.msra.mxu0 0.0
        %565 = vmatprep.subr.mxu0 0.0
        %566 = vmatpush1.msra.mxu0 0.0
        %567 = vmatprep.subr.mxu0 0.0
        %568 = vmatpush1.msra.mxu0 0.0
        %569 = vmatprep.subr.mxu0 0.0
        %570 = vmatpush1.msra.mxu0 0.0
        %571 = vmatprep.subr.mxu0 0.0
        %572 = vmatpush1.msra.mxu0 0.0
        %573 = vmatprep.subr.mxu0 0.0
        %574 = vmatpush1.msra.mxu0 0.0
        %575 = vmatprep.subr.mxu0 0.0
        %576 = vmatpush1.msra.mxu0 0.0
        %577 = vmatprep.subr.mxu0 0.0
        %578 = vmatpush1.msra.mxu0 0.0
        %579 = vmatprep.subr.mxu0 0.0
        %580 = vmatpush1.msra.mxu0 0.0
        %581 = vmatprep.subr.mxu0 0.0
        %582 = vmatpush1.msra.mxu0 0.0
        %583 = vmatprep.subr.mxu0 0.0
        %584 = vmatpush1.msra.mxu0 0.0
        %585 = vmatprep.subr.mxu0 0.0
        %586 = vmatpush1.msra.mxu0 0.0
        %587 = vmatprep.subr.mxu0 0.0
        %588 = vmatpush1.msra.mxu0 0.0
        %589 = vmatprep.mubr.f32.mxu0 0.0
        %590 = vmatmul.mubr.f32.gmra.mrb[0].mxu0 %v478
        %v591 = vpop.f32.mrb[0].mxu0
        %v592 = vadd.f32 0.0, %v591
        %v593 = vpop.f32.mrb[0].mxu0
        %594 = vmatprep.mubr.f32.mxu0 0.0
        %595 = vmatmul.mubr.f32.gmra.mrb[0].mxu0 %v481
        %v596 = vpop.f32.mrb[0].mxu0
        %v597 = vadd.f32 0.0, %v596
        %v598 = vpop.f32.mrb[0].mxu0
        %599 = vmatprep.mubr.f32.mxu0 0.0
        %600 = vmatmul.mubr.f32.gmra.mrb[0].mxu0 %v484
        %v601 = vpop.f32.mrb[0].mxu0
        %v602 = vadd.f32 0.0, %v601
        %v603 = vpop.f32.mrb[0].mxu0
        %604 = vmatprep.mubr.f32.mxu0 0.0
        %605 = vmatmul.mubr.f32.gmra.mrb[0].mxu0 %v487
        %v606 = vpop.f32.mrb[0].mxu0
        %v607 = vadd.f32 0.0, %v606
        %v608 = vpop.f32.mrb[0].mxu0
        %609 = vmatprep.mubr.f32.mxu0 0.0
        %610 = vmatmul.mubr.f32.gmra.mrb[0].mxu0 %v490
        %v611 = vpop.f32.mrb[0].mxu0
        %v612 = vadd.f32 0.0, %v611
        %v613 = vpop.f32.mrb[0].mxu0
        %614 = vmatprep.mubr.f32.mxu0 0.0
        %615 = vmatmul.mubr.f32.gmra.mrb[0].mxu0 %v493
        %v616 = vpop.f32.mrb[0].mxu0
        %v617 = vadd.f32 0.0, %v616
        %v618 = vpop.f32.mrb[0].mxu0
        %619 = vmatprep.mubr.f32.mxu0 0.0
        %620 = vmatmul.mubr.f32.gmra.mrb[0].mxu0 %v496
        %v621 = vpop.f32.mrb[0].mxu0
        %v622 = vadd.f32 0.0, %v621
        %v623 = vpop.f32.mrb[0].mxu0
        %624 = vmatprep.mubr.f32.mxu0 0.0
        %625 = vmatmul.mubr.f32.gmra.mrb[0].mxu0 %v499
        %v626 = vpop.f32.mrb[0].mxu0
        %v627 = vadd.f32 0.0, %v626
        %v628 = vpop.f32.mrb[0].mxu0
        %629 = vmatprep.mubr.f32.mxu0 0.0
        %630 = vmatmul.mubr.f32.gmra.mrb[0].mxu0 %v502
        %v631 = vpop.f32.mrb[0].mxu0
        %v632 = vadd.f32 0.0, %v631
        %v633 = vpop.f32.mrb[0].mxu0
        %634 = vmatprep.mubr.f32.mxu0 0.0
        %635 = vmatmul.mubr.f32.gmra.mrb[0].mxu0 %v505
        %v636 = vpop.f32.mrb[0].mxu0
        %v637 = vadd.f32 0.0, %v636
        %v638 = vpop.f32.mrb[0].mxu0
        %639 = vmatprep.mubr.f32.mxu0 0.0
        %640 = vmatmul.mubr.f32.gmra.mrb[0].mxu0 %v508
        %v641 = vpop.f32.mrb[0].mxu0
        %v642 = vadd.f32 0.0, %v641
        %v643 = vpop.f32.mrb[0].mxu0
        %644 = vmatprep.mubr.f32.mxu0 0.0
        %645 = vmatmul.mubr.f32.gmra.mrb[0].mxu0 %v511
        %v646 = vpop.f32.mrb[0].mxu0
        %v647 = vadd.f32 0.0, %v646
        %v648 = vpop.f32.mrb[0].mxu0
        %649 = vmatprep.mubr.f32.mxu0 0.0
        %650 = vmatmul.mubr.f32.gmra.mrb[0].mxu0 %v514
        %v651 = vpop.f32.mrb[0].mxu0
        %v652 = vadd.f32 0.0, %v651
        %v653 = vpop.f32.mrb[0].mxu0
        %654 = vmatprep.mubr.f32.mxu0 0.0
        %655 = vmatmul.mubr.f32.gmra.mrb[0].mxu0 %v517
        %v656 = vpop.f32.mrb[0].mxu0
        %v657 = vadd.f32 0.0, %v656
        %v658 = vpop.f32.mrb[0].mxu0
        %659 = vmatprep.mubr.f32.mxu0 0.0
        %660 = vmatmul.mubr.f32.gmra.mrb[0].mxu0 %v520
        %v661 = vpop.f32.mrb[0].mxu0
        %v662 = vadd.f32 0.0, %v661
        %v663 = vpop.f32.mrb[0].mxu0
        %664 = vmatprep.mubr.f32.mxu0 0.0
        %665 = vmatmul.mubr.f32.gmra.mrb[0].mxu0 %v523
        %v666 = vpop.f32.mrb[0].mxu0
        %v667 = vadd.f32 0.0, %v666
        %v668 = vpop.f32.mrb[0].mxu0
        %669 = vdwg.mxu0
        %670 = vset.pattern.permute.xlu0 0
        %671 = vperm.xlu0 %670, %v360
        %v672 = vpop.permute.xlu0 %671
        %673 = vset.pattern.permute.xlu0 0
        %674 = vperm.xlu0 %673, %v361
        %v675 = vpop.permute.xlu0 %674
        %676 = vset.pattern.permute.xlu0 0
        %677 = vperm.xlu0 %676, %v362
        %v678 = vpop.permute.xlu0 %677
        %679 = vset.pattern.permute.xlu0 0
        %680 = vperm.xlu0 %679, %v363
        %v681 = vpop.permute.xlu0 %680
        %682 = vset.pattern.permute.xlu0 0
        %683 = vperm.xlu0 %682, %v364
        %v684 = vpop.permute.xlu0 %683
        %685 = vset.pattern.permute.xlu0 0
        %686 = vperm.xlu0 %685, %v365
        %v687 = vpop.permute.xlu0 %686
        %688 = vset.pattern.permute.xlu0 0
        %689 = vperm.xlu0 %688, %v366
        %v690 = vpop.permute.xlu0 %689
        %691 = vset.pattern.permute.xlu0 0
        %692 = vperm.xlu0 %691, %v367
        %v693 = vpop.permute.xlu0 %692
        %694 = vset.pattern.permute.xlu0 0
        %695 = vperm.xlu0 %694, %v368
        %v696 = vpop.permute.xlu0 %695
        %697 = vset.pattern.permute.xlu0 0
        %698 = vperm.xlu0 %697, %v369
        %v699 = vpop.permute.xlu0 %698
        %700 = vset.pattern.permute.xlu0 0
        %701 = vperm.xlu0 %700, %v370
        %v702 = vpop.permute.xlu0 %701
        %703 = vset.pattern.permute.xlu0 0
        %704 = vperm.xlu0 %703, %v371
        %v705 = vpop.permute.xlu0 %704
        %706 = vset.pattern.permute.xlu0 0
        %707 = vperm.xlu0 %706, %v372
        %v708 = vpop.permute.xlu0 %707
        %709 = vset.pattern.permute.xlu0 0
        %710 = vperm.xlu0 %709, %v373
        %v711 = vpop.permute.xlu0 %710
        %712 = vset.pattern.permute.xlu0 0
        %713 = vperm.xlu0 %712, %v374
        %v714 = vpop.permute.xlu0 %713
        %715 = vset.pattern.permute.xlu0 0
        %716 = vperm.xlu0 %715, %v375
        %v717 = vpop.permute.xlu0 %716
        %vm718 = vcmp.eq.s32.totalorder %v377, %v672
        %vm719 = vcmp.eq.s32.totalorder %v377, %v675
        %vm720 = vcmp.eq.s32.totalorder %v377, %v678
        %vm721 = vcmp.eq.s32.totalorder %v377, %v681
        %vm722 = vcmp.eq.s32.totalorder %v377, %v684
        %vm723 = vcmp.eq.s32.totalorder %v377, %v687
        %vm724 = vcmp.eq.s32.totalorder %v377, %v690
        %vm725 = vcmp.eq.s32.totalorder %v377, %v693
        %vm726 = vcmp.eq.s32.totalorder %v377, %v696
        %vm727 = vcmp.eq.s32.totalorder %v377, %v699
        %vm728 = vcmp.eq.s32.totalorder %v377, %v702
        %vm729 = vcmp.eq.s32.totalorder %v377, %v705
        %vm730 = vcmp.eq.s32.totalorder %v377, %v708
        %vm731 = vcmp.eq.s32.totalorder %v377, %v711
        %vm732 = vcmp.eq.s32.totalorder %v377, %v714
        %vm733 = vcmp.eq.s32.totalorder %v377, %v717
        %v734 = vsel %vm718, %v592, 0.0
        %v735 = vsel %vm719, %v597, 0.0
        %v736 = vsel %vm720, %v602, 0.0
        %v737 = vsel %vm721, %v607, 0.0
        %v738 = vsel %vm722, %v612, 0.0
        %v739 = vsel %vm723, %v617, 0.0
        %v740 = vsel %vm724, %v622, 0.0
        %v741 = vsel %vm725, %v627, 0.0
        %v742 = vsel %vm726, %v632, 0.0
        %v743 = vsel %vm727, %v637, 0.0
        %v744 = vsel %vm728, %v642, 0.0
        %v745 = vsel %vm729, %v647, 0.0
        %v746 = vsel %vm730, %v652, 0.0
        %v747 = vsel %vm731, %v657, 0.0
        %v748 = vsel %vm732, %v662, 0.0
        %v749 = vsel %vm733, %v667, 0.0
        %v750 = vsel %vm476, %v734, 0.0
        %751 = vadd.xlane.f32.xlu0 %v750
        %v752 = vpop.xlane.xlu0 %751
        %v753 = vsel %vm476, %v735, 0.0
        %754 = vadd.xlane.f32.xlu0 %v753
        %v755 = vpop.xlane.xlu0 %754
        %v756 = vsel %vm476, %v736, 0.0
        %757 = vadd.xlane.f32.xlu0 %v756
        %v758 = vpop.xlane.xlu0 %757
        %v759 = vsel %vm476, %v737, 0.0
        %760 = vadd.xlane.f32.xlu0 %v759
        %v761 = vpop.xlane.xlu0 %760
        %v762 = vsel %vm476, %v738, 0.0
        %763 = vadd.xlane.f32.xlu0 %v762
        %v764 = vpop.xlane.xlu0 %763
        %v765 = vsel %vm476, %v739, 0.0
        %766 = vadd.xlane.f32.xlu0 %v765
        %v767 = vpop.xlane.xlu0 %766
        %v768 = vsel %vm476, %v740, 0.0
        %769 = vadd.xlane.f32.xlu0 %v768
        %v770 = vpop.xlane.xlu0 %769
        %v771 = vsel %vm476, %v741, 0.0
        %772 = vadd.xlane.f32.xlu0 %v771
        %v773 = vpop.xlane.xlu0 %772
        %v774 = vsel %vm476, %v742, 0.0
        %775 = vadd.xlane.f32.xlu0 %v774
        %v776 = vpop.xlane.xlu0 %775
        %v777 = vsel %vm476, %v743, 0.0
        %778 = vadd.xlane.f32.xlu0 %v777
        %v779 = vpop.xlane.xlu0 %778
        %v780 = vsel %vm476, %v744, 0.0
        %781 = vadd.xlane.f32.xlu0 %v780
        %v782 = vpop.xlane.xlu0 %781
        %v783 = vsel %vm476, %v745, 0.0
        %784 = vadd.xlane.f32.xlu0 %v783
        %v785 = vpop.xlane.xlu0 %784
        %v786 = vsel %vm476, %v746, 0.0
        %787 = vadd.xlane.f32.xlu0 %v786
        %v788 = vpop.xlane.xlu0 %787
        %v789 = vsel %vm476, %v747, 0.0
        %790 = vadd.xlane.f32.xlu0 %v789
        %v791 = vpop.xlane.xlu0 %790
        %v792 = vsel %vm476, %v748, 0.0
        %793 = vadd.xlane.f32.xlu0 %v792
        %v794 = vpop.xlane.xlu0 %793
        %v795 = vsel %vm476, %v749, 0.0
        %796 = vadd.xlane.f32.xlu0 %v795
        %v797 = vpop.xlane.xlu0 %796
        %v798 = vld [vmem:[%s338] sm:$0xff]
        %v799 = vld [vmem:[%s338 + $0x8] sm:$0xff]
        %v800 = vld [vmem:[%s338 + $0x10] sm:$0xff]
        %v801 = vld [vmem:[%s338 + $0x18] sm:$0xff]
        %v802 = vld [vmem:[%s338 + $0x20] sm:$0xff]
        %v803 = vld [vmem:[%s338 + $0x28] sm:$0xff]
        %v804 = vld [vmem:[%s338 + $0x30] sm:$0xff]
        %v805 = vld [vmem:[%s338 + $0x38] sm:$0xff]
        %v806 = vld [vmem:[%s338 + $0x40] sm:$0xff]
        %v807 = vld [vmem:[%s338 + $0x48] sm:$0xff]
        %v808 = vld [vmem:[%s338 + $0x50] sm:$0xff]
        %v809 = vld [vmem:[%s338 + $0x58] sm:$0xff]
        %v810 = vld [vmem:[%s338 + $0x60] sm:$0xff]
        %v811 = vld [vmem:[%s338 + $0x68] sm:$0xff]
        %v812 = vld [vmem:[%s338 + $0x70] sm:$0xff]
        %v813 = vld [vmem:[%s338 + $0x78] sm:$0xff]
        %v814 = vld [vmem:[%s343] sm:$0xff]
        %v815 = vld [vmem:[%s343 + $0x8] sm:$0xff]
        %v816 = vld [vmem:[%s343 + $0x10] sm:$0xff]
        %v817 = vld [vmem:[%s343 + $0x18] sm:$0xff]
        %v818 = vld [vmem:[%s343 + $0x20] sm:$0xff]
        %v819 = vld [vmem:[%s343 + $0x28] sm:$0xff]
        %v820 = vld [vmem:[%s343 + $0x30] sm:$0xff]
        %v821 = vld [vmem:[%s343 + $0x38] sm:$0xff]
        %v822 = vld [vmem:[%s343 + $0x40] sm:$0xff]
        %v823 = vld [vmem:[%s343 + $0x48] sm:$0xff]
        %v824 = vld [vmem:[%s343 + $0x50] sm:$0xff]
        %v825 = vld [vmem:[%s343 + $0x58] sm:$0xff]
        %v826 = vld [vmem:[%s343 + $0x60] sm:$0xff]
        %v827 = vld [vmem:[%s343 + $0x68] sm:$0xff]
        %v828 = vld [vmem:[%s343 + $0x70] sm:$0xff]
        %v829 = vld [vmem:[%s343 + $0x78] sm:$0xff]
        %v830 = vsub.f32 %v752, %v798
        %v831 = vsub.f32 %v755, %v799
        %v832 = vsub.f32 %v758, %v800
        %v833 = vsub.f32 %v761, %v801
        %v834 = vsub.f32 %v764, %v802
        %v835 = vsub.f32 %v767, %v803
        %v836 = vsub.f32 %v770, %v804
        %v837 = vsub.f32 %v773, %v805
        %v838 = vsub.f32 %v776, %v806
        %v839 = vsub.f32 %v779, %v807
        %v840 = vsub.f32 %v782, %v808
        %v841 = vsub.f32 %v785, %v809
        %v842 = vsub.f32 %v788, %v810
        %v843 = vsub.f32 %v791, %v811
        %v844 = vsub.f32 %v794, %v812
        %v845 = vsub.f32 %v797, %v813
        %v846 = vand.u32 2147483647, %v830
        %v847 = vand.u32 2147483647, %v831
        %v848 = vand.u32 2147483647, %v832
        %v849 = vand.u32 2147483647, %v833
        %v850 = vand.u32 2147483647, %v834
        %v851 = vand.u32 2147483647, %v835
        %v852 = vand.u32 2147483647, %v836
        %v853 = vand.u32 2147483647, %v837
        %v854 = vand.u32 2147483647, %v838
        %v855 = vand.u32 2147483647, %v839
        %v856 = vand.u32 2147483647, %v840
        %v857 = vand.u32 2147483647, %v841
        %v858 = vand.u32 2147483647, %v842
        %v859 = vand.u32 2147483647, %v843
        %v860 = vand.u32 2147483647, %v844
        %v861 = vand.u32 2147483647, %v845
        %v862 = vmul.f32 %v846, %v814
        %v863 = vmul.f32 %v847, %v815
        %v864 = vmul.f32 %v848, %v816
        %v865 = vmul.f32 %v849, %v817
        %v866 = vmul.f32 %v850, %v818
        %v867 = vmul.f32 %v851, %v819
        %v868 = vmul.f32 %v852, %v820
        %v869 = vmul.f32 %v853, %v821
        %v870 = vmul.f32 %v854, %v822
        %v871 = vmul.f32 %v855, %v823
        %v872 = vmul.f32 %v856, %v824
        %v873 = vmul.f32 %v857, %v825
        %v874 = vmul.f32 %v858, %v826
        %v875 = vmul.f32 %v859, %v827
        %v876 = vmul.f32 %v860, %v828
        %v877 = vmul.f32 %v861, %v829
        %vm878 = vcmask 7168
        %v879 = vsel %vm878, %v862, 0.0
        %v880 = vsel %vm878, %v863, 0.0
        %v881 = vadd.f32 %v879, %v880
        %v882 = vsel %vm878, %v864, 0.0
        %v883 = vadd.f32 %v881, %v882
        %v884 = vsel %vm878, %v865, 0.0
        %v885 = vadd.f32 %v883, %v884
        %v886 = vsel %vm878, %v866, 0.0
        %v887 = vadd.f32 %v885, %v886
        %v888 = vsel %vm878, %v867, 0.0
        %v889 = vadd.f32 %v887, %v888
        %v890 = vsel %vm878, %v868, 0.0
        %v891 = vadd.f32 %v889, %v890
        %v892 = vsel %vm878, %v869, 0.0
        %v893 = vadd.f32 %v891, %v892
        %v894 = vsel %vm878, %v870, 0.0
        %v895 = vadd.f32 %v893, %v894
        %v896 = vsel %vm878, %v871, 0.0
        %v897 = vadd.f32 %v895, %v896
        %v898 = vsel %vm878, %v872, 0.0
        %v899 = vadd.f32 %v897, %v898
        %v900 = vsel %vm878, %v873, 0.0
        %v901 = vadd.f32 %v899, %v900
        %v902 = vsel %vm878, %v874, 0.0
        %v903 = vadd.f32 %v901, %v902
        %v904 = vsel %vm878, %v875, 0.0
        %v905 = vadd.f32 %v903, %v904
        %v906 = vsel %vm878, %v876, 0.0
        %v907 = vadd.f32 %v905, %v906
        %v908 = vsel %vm878, %v877, 0.0
        %v909 = vadd.f32 %v907, %v908
        %910 = vadd.xlane.f32.xlu0 %v909
        %v911 = vpop.xlane.xlu0 %910
        %v912 = vrot.slane %v911, 4
        %v913 = vadd.f32 %v911, %v912
        %v914 = vrot.slane %v913, 2
        %v915 = vadd.f32 %v913, %v914
        %v916 = vrot.slane %v915, 1
        %v917 = vadd.f32 %v915, %v916
        %s918 = vtos %v917
        %v919 = vstv %s918
        %920 = vst [vmem:[%s310] sm:$0x1] %v919
        %s921 = sand.u32 %s175, 1
        %s922 = scalar_lea.sflag [#allocation3], %s921
        %s923 = sand.u32 %s175, 1
        %s924 = scalar_lea.vmem [#allocation2], %s923
        // Predicated region
        $region41: #{tpu_custom_call.1} parent=39 // pred_check
          %p925 = pneg %p185
        $region42: #{tpu_custom_call.1} parent=39 // pred_check_branch
          %927 = sbr.rel (%p925) target = $region44
        $region43: #{tpu_custom_call.1} parent=39 // pred_region
          %s929 = ssub.s32 16, 16
          %930 = vsyncadd %s922, %s929
          %s931 = smul.addr %s23, 2
          %s932 = sadd.s32 %s24, %s931
          %s933 = smul.addr %s932, 16
          %s934 = scalar_lea.hbm %s5, %s933
          %s936 = sshll.u32 %s924, 4
          %s937 = int_to_ptr.vmem [resolvable:$true] %s936
          %939 = dma.vmem_to_hbm [thread:$0]  %s937, 16, %s934, %s922
        $region44: #{tpu_custom_call.1} parent=39 // pred_fallthru
          _
      $region40: #{tpu_custom_call.1} parent=5 // pred_fallthru
        _
      %p940 = scmp.le.s32.totalorder 2, %s14
      // Predicated region
      $region45: #{tpu_custom_call.1} parent=5 // pred_check
        %p941 = pneg %p940
      $region46: #{tpu_custom_call.1} parent=5 // pred_check_branch
        %943 = sbr.rel (%p941) target = $region48
      $region47: #{tpu_custom_call.1} parent=5 // pred_region
        %s944 = ssub.s32 %s14, 2
        // Predicated region
        $region49: #{tpu_custom_call.1} parent=47 // pred_check
          %p945 = pneg %p191
        $region50: #{tpu_custom_call.1} parent=47 // pred_check_branch
          %947 = sbr.rel (%p945) target = $region52
        $region51: #{tpu_custom_call.1} parent=47 // pred_region
          %s948 = sand.u32 %s176, 1
          %s949 = scalar_lea.sflag [#allocation3], %s948
          %s950 = sand.u32 %s176, 1
          %s951 = scalar_lea.vmem [#allocation2], %s950
          %952 = dma.done %s949, 16
        $region52: #{tpu_custom_call.1} parent=47 // pred_fallthru
          _
      $region48: #{tpu_custom_call.1} parent=5 // pred_fallthru
        _
    $region6: #{tpu_custom_call.1} parent=1 // loop_footer
      %s18 = sadd.s32 1, %s14
    $region7: #{tpu_custom_call.1} parent=1 // loop_footer_branch
      %13 = sbr.rel target = $region3
    $region8: #{tpu_custom_call.1} parent=1 // loop_exit
      _
    %953 = vsyncpa [#allocation3], 1
    %s954 = scalar_lea.sflag [#allocation3], 1
    %955 = vsyncpa %s954, 1

</llo_original>
